<compile_context>
chip_gen: v7x
topology: tpu7x:2x2x1
jax: 0.10.0
libtpu: 0.0.40
codegen_flags: <defaults>
</compile_context>

<pallas_src>
import numpy as np
import jax
import jax.numpy as jnp
from jax.experimental import pallas as pl
from jax.experimental.pallas import tpu as pltpu

# Hyperparameters matching the nn.Module __init__
INPUT_SIZE = 6        # trajectory feature dim (input_size)
HIDDEN = 32           # hidden_size == rnn_input_dim
DIST_DIM = 256        # self.dist_dim


def _round_up(x, m):
    return (x + m - 1) // m * m


def _neighbor_cell_kernel(xd_ref, ht_ref, tp_ref,          # (tn, ·) row tiles
                          we_ref, wi_ref, wh_ref,           # packed weights (resident)
                          bi_ref, bh_ref,                    # packed biases (1, 3H)
                          out_ref):
    H = out_ref.shape[1]
    mm_dtype = wi_ref.dtype

    # social_emb: one K=(hidden+dist_dim) matmul; traj projection (+ b_emb)
    # was precomputed per row in the wrapper and arrives as tp_ref.
    x = jnp.dot(xd_ref[...], we_ref[...], preferred_element_type=jnp.float32)
    x = jnp.maximum(x + tp_ref[...], 0.0)                    # (tn, H) f32

    # GRUCell: two packed matmuls (N = 3H = 96 output columns).
    h = ht_ref[...]                                          # (tn, H) f32
    gi = jnp.dot(x.astype(mm_dtype), wi_ref[...],
                 preferred_element_type=jnp.float32) + bi_ref[...]
    gh = jnp.dot(h.astype(mm_dtype), wh_ref[...],
                 preferred_element_type=jnp.float32) + bh_ref[...]

    # Static lane slices to split gates (PyTorch r, z, n ordering).
    rz = jax.nn.sigmoid(gi[:, :2 * H] + gh[:, :2 * H])
    r = rz[:, :H]
    z = rz[:, H:]
    n = jnp.tanh(gi[:, 2 * H:] + r * gh[:, 2 * H:])
    out_ref[...] = ((1.0 - z) * n + z * h).astype(out_ref.dtype)


def neighbor_cell_forward(traj_input, neighbor_t, dist, starts, ends, ht,
                          params, *, tile_rows=512):
    """Pallas forward of NeighborCell. `params` comes from prepare_params."""
    w_e, w_et, b_emb, w_i, w_h, b_i, b_h = params
    N, Hn = neighbor_t.shape
    Dd = dist.shape[1]
    B = traj_input.shape[0]
    H = ht.shape[1]
    mm_dtype = w_e.dtype

    # ---- row-tile size: big tiles (>=256 amortize the per-step overhead),
    # but keep the grid >= 2 steps when rows allow it (v7x dual-TC sharding).
    tile_rows = _round_up(max(tile_rows, 8), 8)
    n_ceil8 = _round_up(max(N, 1), 8)
    tn = min(tile_rows, n_ceil8)
    if n_ceil8 // tn < 2 and n_ceil8 >= 16:
        tn = _round_up(n_ceil8 // 2, 8)
    n_pad = _round_up(n_ceil8, tn)
    grid = n_pad // tn

    # ---- pack [neighbor | dist] into one lane-dense row slab (matmul dtype).
    xd = jnp.concatenate([neighbor_t, dist], axis=1).astype(mm_dtype)
    xd = jnp.pad(xd, ((0, n_pad - N), (0, 0)))
    ht_p = jnp.pad(ht.astype(jnp.float32), ((0, n_pad - N), (0, 0)))

    # ---- per-row traj projection gathered in the wrapper (CSR owner lookup).
    rows = jnp.arange(N, dtype=jnp.int32)
    owner = jnp.searchsorted(ends.astype(jnp.int32), rows, side='right')
    owner = jnp.clip(owner, 0, B - 1)
    traj_proj = traj_input.astype(jnp.float32) @ w_et + b_emb     # (B, H), f32
    tp_rows = jnp.pad(traj_proj[owner], ((0, n_pad - N), (0, 0)))

    def row_spec(cols):
        return pl.BlockSpec((tn, cols), lambda i: (i, 0))

    def const_spec(shape):
        return pl.BlockSpec(shape, lambda i: (0, 0))

    grid_spec = pltpu.PrefetchScalarGridSpec(
        num_scalar_prefetch=0,
        grid=(grid,),
        in_specs=[
            row_spec(Hn + Dd),                 # packed [neighbor | dist]
            row_spec(H),                       # ht (f32)
            row_spec(H),                       # per-row traj projection + b_emb
            const_spec((Hn + Dd, H)),          # W_emb packed (neighbor;dist rows)
            const_spec((H, 3 * H)),            # W_i = [r|z|n]
            const_spec((H, 3 * H)),            # W_h = [r|z|n]
            const_spec((1, 3 * H)),            # b_i packed (r+hr, z+hz, in)
            const_spec((1, 3 * H)),            # b_h packed (0, 0, hn)
        ],
        out_specs=pl.BlockSpec((tn, H), lambda i: (i, 0)),
    )

    out = pl.pallas_call(
        _neighbor_cell_kernel,
        out_shape=jax.ShapeDtypeStruct((n_pad, H), jnp.float32),
        grid_spec=grid_spec,
        compiler_params=pltpu.CompilerParams(
            dimension_semantics=("parallel",)),   # row tiles are independent
    )(xd, ht_p, tp_rows, w_e, w_i, w_h, b_i, b_h)
    return out[:N]


def init_params(key, input_size=INPUT_SIZE, hidden=HIDDEN, dist_dim=DIST_DIM):
    """Canonical (in, out)-layout params for social_emb Linear and GRUCell."""
    ks = jax.random.split(key, 6)
    scale = 0.1
    d_in = hidden + input_size + dist_dim       # cat(neighbor, traj, dist)
    w_emb = scale * jax.random.normal(ks[0], (d_in, hidden), jnp.float32)
    b_emb = scale * jax.random.normal(ks[1], (hidden,), jnp.float32)
    w_ih = scale * jax.random.normal(ks[2], (hidden, 3 * hidden), jnp.float32)
    w_hh = scale * jax.random.normal(ks[3], (hidden, 3 * hidden), jnp.float32)
    b_ih = scale * jax.random.normal(ks[4], (3 * hidden,), jnp.float32)
    b_hh = scale * jax.random.normal(ks[5], (3 * hidden,), jnp.float32)
    return (w_emb, b_emb, w_ih, w_hh, b_ih, b_hh)


def prepare_params(raw, input_size=INPUT_SIZE, hidden=HIDDEN,
                   matmul_dtype=jnp.bfloat16):
    """Pack weights/biases so the kernel does 3 wide matmuls and no concat."""
    w_emb, b_emb, w_ih, w_hh, b_ih, b_hh = raw
    H = hidden
    w_en = w_emb[:H]                               # neighbor-feature rows
    w_et = w_emb[H:H + input_size]                 # target-traj rows (wrapper-side)
    w_ed = w_emb[H + input_size:]                  # dist rows
    w_e = jnp.concatenate([w_en, w_ed], axis=0).astype(matmul_dtype)   # (H+D, H)
    b_i = jnp.concatenate(
        [b_ih[:2 * H] + b_hh[:2 * H], b_ih[2 * H:]]).reshape(1, 3 * H)
    b_h = jnp.concatenate(
        [jnp.zeros((2 * H,), jnp.float32), b_hh[2 * H:]]).reshape(1, 3 * H)
    return (w_e,
            w_et.astype(jnp.float32),
            b_emb.astype(jnp.float32),
            w_ih.astype(matmul_dtype),
            w_hh.astype(matmul_dtype),
            b_i.astype(jnp.float32),
            b_h.astype(jnp.float32))


def reference(traj_input, neighbor_t, dist, starts, ends, ht, raw):
    """Pure-JAX replica of the PyTorch per-sample loop (eval mode, f32)."""
    w_emb, b_emb, w_ih, w_hh, b_ih, b_hh = raw
    H = ht.shape[1]
    outs = []
    for i in range(len(starts)):
        s, e = int(starts[i]), int(ends[i])
        if s == e:                       # the `if start_id == end_id: continue`
            continue
        nb = neighbor_t[s:e]
        dd = dist[s:e]
        tr = jnp.tile(traj_input[i:i + 1], (e - s, 1))
        h = ht[s:e]
        x = jnp.concatenate([nb, tr, dd], axis=-1)
        x = jax.nn.relu(x @ w_emb + b_emb)          # social_emb
        gi = x @ w_ih + b_ih
        gh = h @ w_hh + b_hh
        r = jax.nn.sigmoid(gi[:, :H] + gh[:, :H])
        z = jax.nn.sigmoid(gi[:, H:2 * H] + gh[:, H:2 * H])
        n = jnp.tanh(gi[:, 2 * H:] + r * gh[:, 2 * H:])
        outs.append((1.0 - z) * n + z * h)
    return jnp.concatenate(outs, axis=0)


if __name__ == "__main__":
    key = jax.random.PRNGKey(0)
    kp, kdata = jax.random.split(key)
    raw = init_params(kp)
    params_f32 = prepare_params(raw, matmul_dtype=jnp.float32)
    params_bf16 = prepare_params(raw, matmul_dtype=jnp.bfloat16)

    def make_case(counts, kcase):
        starts_np = np.cumsum([0] + counts[:-1]).astype(np.int32)
        ends_np = (starts_np + np.array(counts, np.int32)).astype(np.int32)
        # CSR layout sanity (assumption the kernel relies on).
        assert ends_np[-1] == int(np.sum(counts))
        assert np.all(starts_np[1:] == ends_np[:-1])
        B = len(counts)
        N = int(ends_np[-1])
        kt, kn, kd, kh = jax.random.split(kcase, 4)
        traj_input = jax.random.normal(kt, (B, INPUT_SIZE), jnp.float32)
        neighbor_t = jax.random.normal(kn, (N, HIDDEN), jnp.float32)
        dist = jax.random.normal(kd, (N, DIST_DIM), jnp.float32)
        ht = jax.random.normal(kh, (N, HIDDEN), jnp.float32)
        return (traj_input, neighbor_t, dist,
                jnp.asarray(starts_np), jnp.asarray(ends_np), ht,
                starts_np, ends_np)

    # Case 1: the empty slice exercises the start_id == end_id skip path.
    # Case 2: odd row count exercises row padding inside the last tile.
    cases = [[3, 0, 5, 8], [10, 0, 20, 7, 20]]
    keys = jax.random.split(kdata, len(cases))

    for counts, kc in zip(cases, keys):
        (traj_input, neighbor_t, dist, starts, ends, ht,
         starts_np, ends_np) = make_case(counts, kc)
        ref = reference(traj_input, neighbor_t, dist, starts_np, ends_np, ht, raw)

        # f32 mode: tight numerical agreement with the PyTorch formula.
        out32 = neighbor_cell_forward(traj_input, neighbor_t, dist,
                                      starts, ends, ht, params_f32)
        out32 = jax.block_until_ready(out32)
        np.testing.assert_allclose(np.asarray(out32), np.asarray(ref),
                                   rtol=1e-4, atol=1e-4)

        # bf16 matmul operands (production mode): looser tolerance.
        out16 = neighbor_cell_forward(traj_input, neighbor_t, dist,
                                      starts, ends, ht, params_bf16)
        out16 = jax.block_until_ready(out16)
        np.testing.assert_allclose(np.asarray(out16), np.asarray(ref),
                                   rtol=5e-2, atol=5e-2)

    print("KERNEL_OK")
</pallas_src>

<mosaic_0001>
module attributes {stable_mosaic.version = 11 : i64} {
  func.func @_neighbor_cell_kernel(%arg0: i32, %arg1: memref<8x288xf32, #tpu.memory_space<vmem>>, %arg2: memref<8x32xf32, #tpu.memory_space<vmem>>, %arg3: memref<8x32xf32, #tpu.memory_space<vmem>>, %arg4: memref<288x32xf32, #tpu.memory_space<vmem>>, %arg5: memref<32x96xf32, #tpu.memory_space<vmem>>, %arg6: memref<32x96xf32, #tpu.memory_space<vmem>>, %arg7: memref<1x96xf32, #tpu.memory_space<vmem>>, %arg8: memref<1x96xf32, #tpu.memory_space<vmem>>, %arg9: memref<8x32xf32, #tpu.memory_space<vmem>>) attributes {dimension_semantics = [#tpu.dimension_semantics<parallel>], iteration_bounds = array<i64: 2>, scalar_prefetch = 0 : i64, scratch_operands = 0 : i64, tpu.core_type = #tpu.core_type<tc>, window_params = [{transform_indices = @transform_0, window_bounds = array<i64: 8, 288>}, {transform_indices = @transform_1, window_bounds = array<i64: 8, 32>}, {transform_indices = @transform_2, window_bounds = array<i64: 8, 32>}, {pipeline_mode = #tpu.pipeline_mode<synchronous>, transform_indices = @transform_3, window_bounds = array<i64: 288, 32>}, {pipeline_mode = #tpu.pipeline_mode<synchronous>, transform_indices = @transform_4, window_bounds = array<i64: 32, 96>}, {pipeline_mode = #tpu.pipeline_mode<synchronous>, transform_indices = @transform_5, window_bounds = array<i64: 32, 96>}, {pipeline_mode = #tpu.pipeline_mode<synchronous>, transform_indices = @transform_6, window_bounds = array<i64: 1, 96>}, {pipeline_mode = #tpu.pipeline_mode<synchronous>, transform_indices = @transform_7, window_bounds = array<i64: 1, 96>}, {transform_indices = @transform_8, window_bounds = array<i64: 8, 32>}]} {
    %c0 = arith.constant 0 : index
    %c0_0 = arith.constant 0 : index
    %0 = vector.load %arg1[%c0, %c0_0] : memref<8x288xf32, #tpu.memory_space<vmem>>, vector<8x288xf32>
    %c0_1 = arith.constant 0 : index
    %c0_2 = arith.constant 0 : index
    %1 = vector.load %arg4[%c0_1, %c0_2] : memref<288x32xf32, #tpu.memory_space<vmem>>, vector<288x32xf32>
    %cst = arith.constant dense<0.000000e+00> : vector<8x32xf32>
    %2 = tpu.matmul %0, %1, %cst {dimension_numbers = #tpu.dot_dimension_numbers<[1], [0], [0], [1], [0, 0, 1, 1], [], []>} : vector<8x288xf32>, vector<288x32xf32>, vector<8x32xf32> -> vector<8x32xf32>
    %c0_3 = arith.constant 0 : index
    %c0_4 = arith.constant 0 : index
    %3 = vector.load %arg3[%c0_3, %c0_4] : memref<8x32xf32, #tpu.memory_space<vmem>>, vector<8x32xf32>
    %4 = arith.addf %2, %3 : vector<8x32xf32>
    %cst_5 = arith.constant 0.000000e+00 : f32
    %5 = vector.broadcast %cst_5 : f32 to vector<8x32xf32>
    %6 = arith.maximumf %4, %5 : vector<8x32xf32>
    %c0_6 = arith.constant 0 : index
    %c0_7 = arith.constant 0 : index
    %7 = vector.load %arg2[%c0_6, %c0_7] : memref<8x32xf32, #tpu.memory_space<vmem>>, vector<8x32xf32>
    %c0_8 = arith.constant 0 : index
    %c0_9 = arith.constant 0 : index
    %8 = vector.load %arg5[%c0_8, %c0_9] : memref<32x96xf32, #tpu.memory_space<vmem>>, vector<32x96xf32>
    %cst_10 = arith.constant dense<0.000000e+00> : vector<8x96xf32>
    %9 = tpu.matmul %6, %8, %cst_10 {dimension_numbers = #tpu.dot_dimension_numbers<[1], [0], [0], [1], [0, 0, 1, 1], [], []>} : vector<8x32xf32>, vector<32x96xf32>, vector<8x96xf32> -> vector<8x96xf32>
    %c0_11 = arith.constant 0 : index
    %c0_12 = arith.constant 0 : index
    %10 = vector.load %arg7[%c0_11, %c0_12] : memref<1x96xf32, #tpu.memory_space<vmem>>, vector<1x96xf32>
    %11 = vector.broadcast %10 : vector<1x96xf32> to vector<8x96xf32>
    %12 = arith.addf %9, %11 : vector<8x96xf32>
    %c0_13 = arith.constant 0 : index
    %c0_14 = arith.constant 0 : index
    %13 = vector.load %arg6[%c0_13, %c0_14] : memref<32x96xf32, #tpu.memory_space<vmem>>, vector<32x96xf32>
    %cst_15 = arith.constant dense<0.000000e+00> : vector<8x96xf32>
    %14 = tpu.matmul %7, %13, %cst_15 {dimension_numbers = #tpu.dot_dimension_numbers<[1], [0], [0], [1], [0, 0, 1, 1], [], []>} : vector<8x32xf32>, vector<32x96xf32>, vector<8x96xf32> -> vector<8x96xf32>
    %c0_16 = arith.constant 0 : index
    %c0_17 = arith.constant 0 : index
    %15 = vector.load %arg8[%c0_16, %c0_17] : memref<1x96xf32, #tpu.memory_space<vmem>>, vector<1x96xf32>
    %16 = vector.broadcast %15 : vector<1x96xf32> to vector<8x96xf32>
    %17 = arith.addf %14, %16 : vector<8x96xf32>
    %18 = vector.extract_strided_slice %12 {offsets = [0, 0], sizes = [8, 64], strides = [1, 1]} : vector<8x96xf32> to vector<8x64xf32>
    %19 = vector.extract_strided_slice %17 {offsets = [0, 0], sizes = [8, 64], strides = [1, 1]} : vector<8x96xf32> to vector<8x64xf32>
    %20 = arith.addf %18, %19 : vector<8x64xf32>
    %21 = arith.negf %20 : vector<8x64xf32>
    %22 = math.exp %21 : vector<8x64xf32>
    %cst_18 = arith.constant 1.000000e+00 : f32
    %23 = vector.broadcast %cst_18 : f32 to vector<8x64xf32>
    %24 = arith.addf %23, %22 : vector<8x64xf32>
    %25 = arith.divf %23, %24 : vector<8x64xf32>
    %26 = vector.extract_strided_slice %25 {offsets = [0, 0], sizes = [8, 32], strides = [1, 1]} : vector<8x64xf32> to vector<8x32xf32>
    %27 = vector.extract_strided_slice %25 {offsets = [0, 32], sizes = [8, 32], strides = [1, 1]} : vector<8x64xf32> to vector<8x32xf32>
    %28 = vector.extract_strided_slice %12 {offsets = [0, 64], sizes = [8, 32], strides = [1, 1]} : vector<8x96xf32> to vector<8x32xf32>
    %29 = vector.extract_strided_slice %17 {offsets = [0, 64], sizes = [8, 32], strides = [1, 1]} : vector<8x96xf32> to vector<8x32xf32>
    %30 = arith.mulf %26, %29 : vector<8x32xf32>
    %31 = arith.addf %28, %30 : vector<8x32xf32>
    %32 = math.tanh %31 : vector<8x32xf32>
    %cst_19 = arith.constant 1.000000e+00 : f32
    %33 = vector.broadcast %cst_19 : f32 to vector<8x32xf32>
    %34 = arith.subf %33, %27 : vector<8x32xf32>
    %35 = arith.mulf %34, %32 : vector<8x32xf32>
    %36 = arith.mulf %27, %7 : vector<8x32xf32>
    %37 = arith.addf %35, %36 : vector<8x32xf32>
    %c0_20 = arith.constant 0 : index
    %c0_21 = arith.constant 0 : index
    %38 = vector.load %arg9[%c0_20, %c0_21] : memref<8x32xf32, #tpu.memory_space<vmem>>, vector<8x32xf32>
    tpu.vector_store %arg9[%c0_20, %c0_21], %37 {strides = array<i32>} : memref<8x32xf32, #tpu.memory_space<vmem>>, vector<8x32xf32>,
    return
  }
  func.func @transform_0(%arg0: i32) -> (i32, i32) {
    %c0_i32 = arith.constant 0 : i32
    %c0_i32_0 = arith.constant 0 : i32
    return %arg0, %c0_i32 : i32, i32
  }
  func.func @transform_1(%arg0: i32) -> (i32, i32) {
    %c0_i32 = arith.constant 0 : i32
    %c0_i32_0 = arith.constant 0 : i32
    return %arg0, %c0_i32 : i32, i32
  }
  func.func @transform_2(%arg0: i32) -> (i32, i32) {
    %c0_i32 = arith.constant 0 : i32
    %c0_i32_0 = arith.constant 0 : i32
    return %arg0, %c0_i32 : i32, i32
  }
  func.func @transform_3(%arg0: i32) -> (i32, i32) {
    %c0_i32 = arith.constant 0 : i32
    %c0_i32_0 = arith.constant 0 : i32
    %c0_i32_1 = arith.constant 0 : i32
    return %c0_i32, %c0_i32_0 : i32, i32
  }
  func.func @transform_4(%arg0: i32) -> (i32, i32) {
    %c0_i32 = arith.constant 0 : i32
    %c0_i32_0 = arith.constant 0 : i32
    %c0_i32_1 = arith.constant 0 : i32
    return %c0_i32, %c0_i32_0 : i32, i32
  }
  func.func @transform_5(%arg0: i32) -> (i32, i32) {
    %c0_i32 = arith.constant 0 : i32
    %c0_i32_0 = arith.constant 0 : i32
    %c0_i32_1 = arith.constant 0 : i32
    return %c0_i32, %c0_i32_0 : i32, i32
  }
  func.func @transform_6(%arg0: i32) -> (i32, i32) {
    %c0_i32 = arith.constant 0 : i32
    %c0_i32_0 = arith.constant 0 : i32
    %c0_i32_1 = arith.constant 0 : i32
    return %c0_i32, %c0_i32_0 : i32, i32
  }
  func.func @transform_7(%arg0: i32) -> (i32, i32) {
    %c0_i32 = arith.constant 0 : i32
    %c0_i32_0 = arith.constant 0 : i32
    %c0_i32_1 = arith.constant 0 : i32
    return %c0_i32, %c0_i32_0 : i32, i32
  }
  func.func @transform_8(%arg0: i32) -> (i32, i32) {
    %c0_i32 = arith.constant 0 : i32
    %c0_i32_0 = arith.constant 0 : i32
    return %arg0, %c0_i32 : i32, i32
  }
}

</mosaic_0001>

<llo_original>
// kernel: tpu_custom_call.1
$region0: #{tpu_custom_call.1}
  #allocation0 [shape = 'u32[]', space=smem, size = 0x4, offset = 0x4, fixed_abs, tag = 'smem constant byte address 0x4 - core index']
  #allocation1 [shape = 'u32[144,128]{1,0:T(1,128)}', space=vmem, size = 0x12000, scoped, tag = 'internal scratch']
  %s0 = inlined_call_operand.vmem [shape: f32[16,288], index: 0, kind: input, shape index: {}]
  %s1 = inlined_call_operand.vmem [shape: f32[16,32], index: 1, kind: input, shape index: {}]
  %s2 = inlined_call_operand.vmem [shape: f32[16,32], index: 2, kind: input, shape index: {}]
  %s3 = inlined_call_operand.vmem [shape: f32[288,32], index: 3, kind: input, shape index: {}]
  %s4 = inlined_call_operand.vmem [shape: f32[32,96], index: 4, kind: input, shape index: {}]
  %s5 = inlined_call_operand.vmem [shape: f32[32,96], index: 5, kind: input, shape index: {}]
  %s6 = inlined_call_operand.vmem [shape: f32[1,96], index: 6, kind: input, shape index: {}]
  %s7 = inlined_call_operand.vmem [shape: f32[1,96], index: 7, kind: input, shape index: {}]
  %s8 = inlined_call_operand.hbm [shape: f32[16,32], index: 8, kind: output, shape index: {}]
  %s9 = sld [smem:[#allocation0]]
  $region65: #{tpu_custom_call.1} parent=0
    _
  %s11 = ssub.s32 1, %s9
  %s12 = scalar_select 0, %s11, %s9
  $region1: #{tpu_custom_call.1} parent=0
    #allocation2 [shape = 'u8[8192]{0}', space=vmem, size = 0x2000, scoped, tag = 'output window, operand 0']
    #allocation3 [shape = 's32[2]{0}', space=sflag, size = 0x8, scoped, tag = 'scoped memory for tpu_custom_call.1']
    %13 = vsyncpa [#allocation3], 0
    %s14 = scalar_lea.sflag [#allocation3], 1
    %15 = vsyncpa %s14, 0
    loop: start=0, step=1, limit=4
    $region2: #{tpu_custom_call.1} parent=1 // loop_pre_header
      _
    $region3: #{tpu_custom_call.1} parent=1 // loop_header
      %s17 = sphi 0, %s21
      %p18 = scmp.ge.s32.totalorder %s17, 4
      %s27 = sphi 0, %s29
      %s30 = sphi 0, %s27
      %s31 = sphi 0, %s30
      %s47 = sphi 0, %s31
      %s53 = sphi 0, %s55
      %s56 = sphi 0, %s53
      %s57 = sphi 0, %s56
      %s73 = sphi 0, %s57
      %s79 = sphi 0, %s81
      %s82 = sphi 0, %s79
      %s83 = sphi 0, %s82
      %s99 = sphi 0, %s83
      %s103 = sphi 0, %s103
      %s105 = sphi 0, %s103
      %s106 = sphi 0, %s105
      %s120 = sphi 0, %s106
      %s124 = sphi 0, %s124
      %s126 = sphi 0, %s124
      %s127 = sphi 0, %s126
      %s141 = sphi 0, %s127
      %s145 = sphi 0, %s145
      %s147 = sphi 0, %s145
      %s148 = sphi 0, %s147
      %s162 = sphi 0, %s148
      %s166 = sphi 0, %s166
      %s168 = sphi 0, %s166
      %s169 = sphi 0, %s168
      %s183 = sphi 0, %s169
      %s187 = sphi 0, %s187
      %s189 = sphi 0, %s187
      %s190 = sphi 0, %s189
      %s204 = sphi 0, %s190
      %s210 = sphi 0, %s212
      %s213 = sphi 0, %s210
      %s214 = sphi 0, %s213
      %s230 = sphi 0, %s214
    $region4: #{tpu_custom_call.1} parent=1 // loop_header_branch
      %20 = sbr.rel (%p18) target = $region8
    $region5: #{tpu_custom_call.1} parent=1 // loop_body
      %s22 = ssub.s32 %s17, 1
      %s23 = ssub.s32 %s17, 2
      %s24 = sadd.s32 %s17, 1
      %s25 = ssub.s32 %s17, %s24
      %p26 = scmp.eq.s32.totalorder %s25, 0
      %s28 = sadd.s32 %s27, 1
      %s29 = scalar_select %p26, %s27, %s28
      %p32 = pneg %p26
      %p33 = scmp.eq.s32.totalorder %s17, 1
      %p34 = por %p32, %p33
      %p35 = scmp.ne.s32.totalorder %s27, %s30
      %p36 = scmp.eq.s32.totalorder %s17, 0
      %p37 = por %p35, %p36
      %p38 = scmp.ne.s32.totalorder %s27, %s30
      %p39 = scmp.eq.s32.totalorder %s22, 1
      %p40 = por %p38, %p39
      %p41 = scmp.ne.s32.totalorder %s30, %s31
      %p42 = scmp.eq.s32.totalorder %s22, 0
      %p43 = por %p41, %p42
      %p44 = scmp.ne.s32.totalorder %s30, %s31
      %p45 = scmp.eq.s32.totalorder %s23, 1
      %p46 = por %p44, %p45
      %p48 = scmp.ne.s32.totalorder %s31, %s47
      %p49 = scmp.eq.s32.totalorder %s23, 0
      %p50 = por %p48, %p49
      %s51 = ssub.s32 %s17, %s24
      %p52 = scmp.eq.s32.totalorder %s51, 0
      %s54 = sadd.s32 %s53, 1
      %s55 = scalar_select %p52, %s53, %s54
      %p58 = pneg %p52
      %p59 = scmp.eq.s32.totalorder %s17, 1
      %p60 = por %p58, %p59
      %p61 = scmp.ne.s32.totalorder %s53, %s56
      %p62 = scmp.eq.s32.totalorder %s17, 0
      %p63 = por %p61, %p62
      %p64 = scmp.ne.s32.totalorder %s53, %s56
      %p65 = scmp.eq.s32.totalorder %s22, 1
      %p66 = por %p64, %p65
      %p67 = scmp.ne.s32.totalorder %s56, %s57
      %p68 = scmp.eq.s32.totalorder %s22, 0
      %p69 = por %p67, %p68
      %p70 = scmp.ne.s32.totalorder %s56, %s57
      %p71 = scmp.eq.s32.totalorder %s23, 1
      %p72 = por %p70, %p71
      %p74 = scmp.ne.s32.totalorder %s57, %s73
      %p75 = scmp.eq.s32.totalorder %s23, 0
      %p76 = por %p74, %p75
      %s77 = ssub.s32 %s17, %s24
      %p78 = scmp.eq.s32.totalorder %s77, 0
      %s80 = sadd.s32 %s79, 1
      %s81 = scalar_select %p78, %s79, %s80
      %p84 = pneg %p78
      %p85 = scmp.eq.s32.totalorder %s17, 1
      %p86 = por %p84, %p85
      %p87 = scmp.ne.s32.totalorder %s79, %s82
      %p88 = scmp.eq.s32.totalorder %s17, 0
      %p89 = por %p87, %p88
      %p90 = scmp.ne.s32.totalorder %s79, %s82
      %p91 = scmp.eq.s32.totalorder %s22, 1
      %p92 = por %p90, %p91
      %p93 = scmp.ne.s32.totalorder %s82, %s83
      %p94 = scmp.eq.s32.totalorder %s22, 0
      %p95 = por %p93, %p94
      %p96 = scmp.ne.s32.totalorder %s82, %s83
      %p97 = scmp.eq.s32.totalorder %s23, 1
      %p98 = por %p96, %p97
      %p100 = scmp.ne.s32.totalorder %s83, %s99
      %p101 = scmp.eq.s32.totalorder %s23, 0
      %p102 = por %p100, %p101
      %s104 = sadd.s32 %s103, 1
      %p107 = scmp.eq.s32.totalorder %s17, 1
      %p108 = scmp.ne.s32.totalorder %s103, %s105
      %p109 = scmp.eq.s32.totalorder %s17, 0
      %p110 = por %p108, %p109
      %p111 = scmp.ne.s32.totalorder %s103, %s105
      %p112 = scmp.eq.s32.totalorder %s22, 1
      %p113 = por %p111, %p112
      %p114 = scmp.ne.s32.totalorder %s105, %s106
      %p115 = scmp.eq.s32.totalorder %s22, 0
      %p116 = por %p114, %p115
      %p117 = scmp.ne.s32.totalorder %s105, %s106
      %p118 = scmp.eq.s32.totalorder %s23, 1
      %p119 = por %p117, %p118
      %p121 = scmp.ne.s32.totalorder %s106, %s120
      %p122 = scmp.eq.s32.totalorder %s23, 0
      %p123 = por %p121, %p122
      %s125 = sadd.s32 %s124, 1
      %p128 = scmp.eq.s32.totalorder %s17, 1
      %p129 = scmp.ne.s32.totalorder %s124, %s126
      %p130 = scmp.eq.s32.totalorder %s17, 0
      %p131 = por %p129, %p130
      %p132 = scmp.ne.s32.totalorder %s124, %s126
      %p133 = scmp.eq.s32.totalorder %s22, 1
      %p134 = por %p132, %p133
      %p135 = scmp.ne.s32.totalorder %s126, %s127
      %p136 = scmp.eq.s32.totalorder %s22, 0
      %p137 = por %p135, %p136
      %p138 = scmp.ne.s32.totalorder %s126, %s127
      %p139 = scmp.eq.s32.totalorder %s23, 1
      %p140 = por %p138, %p139
      %p142 = scmp.ne.s32.totalorder %s127, %s141
      %p143 = scmp.eq.s32.totalorder %s23, 0
      %p144 = por %p142, %p143
      %s146 = sadd.s32 %s145, 1
      %p149 = scmp.eq.s32.totalorder %s17, 1
      %p150 = scmp.ne.s32.totalorder %s145, %s147
      %p151 = scmp.eq.s32.totalorder %s17, 0
      %p152 = por %p150, %p151
      %p153 = scmp.ne.s32.totalorder %s145, %s147
      %p154 = scmp.eq.s32.totalorder %s22, 1
      %p155 = por %p153, %p154
      %p156 = scmp.ne.s32.totalorder %s147, %s148
      %p157 = scmp.eq.s32.totalorder %s22, 0
      %p158 = por %p156, %p157
      %p159 = scmp.ne.s32.totalorder %s147, %s148
      %p160 = scmp.eq.s32.totalorder %s23, 1
      %p161 = por %p159, %p160
      %p163 = scmp.ne.s32.totalorder %s148, %s162
      %p164 = scmp.eq.s32.totalorder %s23, 0
      %p165 = por %p163, %p164
      %s167 = sadd.s32 %s166, 1
      %p170 = scmp.eq.s32.totalorder %s17, 1
      %p171 = scmp.ne.s32.totalorder %s166, %s168
      %p172 = scmp.eq.s32.totalorder %s17, 0
      %p173 = por %p171, %p172
      %p174 = scmp.ne.s32.totalorder %s166, %s168
      %p175 = scmp.eq.s32.totalorder %s22, 1
      %p176 = por %p174, %p175
      %p177 = scmp.ne.s32.totalorder %s168, %s169
      %p178 = scmp.eq.s32.totalorder %s22, 0
      %p179 = por %p177, %p178
      %p180 = scmp.ne.s32.totalorder %s168, %s169
      %p181 = scmp.eq.s32.totalorder %s23, 1
      %p182 = por %p180, %p181
      %p184 = scmp.ne.s32.totalorder %s169, %s183
      %p185 = scmp.eq.s32.totalorder %s23, 0
      %p186 = por %p184, %p185
      %s188 = sadd.s32 %s187, 1
      %p191 = scmp.eq.s32.totalorder %s17, 1
      %p192 = scmp.ne.s32.totalorder %s187, %s189
      %p193 = scmp.eq.s32.totalorder %s17, 0
      %p194 = por %p192, %p193
      %p195 = scmp.ne.s32.totalorder %s187, %s189
      %p196 = scmp.eq.s32.totalorder %s22, 1
      %p197 = por %p195, %p196
      %p198 = scmp.ne.s32.totalorder %s189, %s190
      %p199 = scmp.eq.s32.totalorder %s22, 0
      %p200 = por %p198, %p199
      %p201 = scmp.ne.s32.totalorder %s189, %s190
      %p202 = scmp.eq.s32.totalorder %s23, 1
      %p203 = por %p201, %p202
      %p205 = scmp.ne.s32.totalorder %s190, %s204
      %p206 = scmp.eq.s32.totalorder %s23, 0
      %p207 = por %p205, %p206
      %s208 = ssub.s32 %s17, %s24
      %p209 = scmp.eq.s32.totalorder %s208, 0
      %s211 = sadd.s32 %s210, 1
      %s212 = scalar_select %p209, %s210, %s211
      %p215 = pneg %p209
      %p216 = scmp.eq.s32.totalorder %s17, 1
      %p217 = por %p215, %p216
      %p218 = scmp.ne.s32.totalorder %s210, %s213
      %p219 = scmp.eq.s32.totalorder %s17, 0
      %p220 = por %p218, %p219
      %p221 = scmp.ne.s32.totalorder %s210, %s213
      %p222 = scmp.eq.s32.totalorder %s22, 1
      %p223 = por %p221, %p222
      %p224 = scmp.ne.s32.totalorder %s213, %s214
      %p225 = scmp.eq.s32.totalorder %s22, 0
      %p226 = por %p224, %p225
      %p227 = scmp.ne.s32.totalorder %s213, %s214
      %p228 = scmp.eq.s32.totalorder %s23, 1
      %p229 = por %p227, %p228
      %p231 = scmp.ne.s32.totalorder %s214, %s230
      %p232 = scmp.eq.s32.totalorder %s23, 0
      %p233 = por %p231, %p232
      %p234 = scmp.le.s32.totalorder 1, %s17
      %p235 = scmp.lt.s32.totalorder %s17, 3
      %p236 = pnand %p234, %p235
      %p237 = pneg %p236
      // Predicated region
      $region9: #{tpu_custom_call.1} parent=5 // pred_check
        _
      $region10: #{tpu_custom_call.1} parent=5 // pred_check_branch
        %239 = sbr.rel (%p236) target = $region12
      $region11: #{tpu_custom_call.1} parent=5 // pred_region
        %s240 = ssub.s32 %s17, 1
        // Predicated region
        $region13: #{tpu_custom_call.1} parent=11 // pred_check
          %p241 = pneg %p116
        $region14: #{tpu_custom_call.1} parent=11 // pred_check_branch
          %243 = sbr.rel (%p241) target = $region16
        $region15: #{tpu_custom_call.1} parent=11 // pred_region
          _
        $region16: #{tpu_custom_call.1} parent=11 // pred_fallthru
          _
        // Predicated region
        $region17: #{tpu_custom_call.1} parent=11 // pred_check
          %p244 = pneg %p137
        $region18: #{tpu_custom_call.1} parent=11 // pred_check_branch
          %246 = sbr.rel (%p244) target = $region20
        $region19: #{tpu_custom_call.1} parent=11 // pred_region
          _
        $region20: #{tpu_custom_call.1} parent=11 // pred_fallthru
          _
        // Predicated region
        $region21: #{tpu_custom_call.1} parent=11 // pred_check
          %p247 = pneg %p158
        $region22: #{tpu_custom_call.1} parent=11 // pred_check_branch
          %249 = sbr.rel (%p247) target = $region24
        $region23: #{tpu_custom_call.1} parent=11 // pred_region
          _
        $region24: #{tpu_custom_call.1} parent=11 // pred_fallthru
          _
        // Predicated region
        $region25: #{tpu_custom_call.1} parent=11 // pred_check
          %p250 = pneg %p179
        $region26: #{tpu_custom_call.1} parent=11 // pred_check_branch
          %252 = sbr.rel (%p250) target = $region28
        $region27: #{tpu_custom_call.1} parent=11 // pred_region
          _
        $region28: #{tpu_custom_call.1} parent=11 // pred_fallthru
          _
        // Predicated region
        $region29: #{tpu_custom_call.1} parent=11 // pred_check
          %p253 = pneg %p200
        $region30: #{tpu_custom_call.1} parent=11 // pred_check_branch
          %255 = sbr.rel (%p253) target = $region32
        $region31: #{tpu_custom_call.1} parent=11 // pred_region
          _
        $region32: #{tpu_custom_call.1} parent=11 // pred_fallthru
          _
      $region12: #{tpu_custom_call.1} parent=5 // pred_fallthru
        _
      %p256 = scmp.lt.s32.totalorder %s17, 2
      // Predicated region
      $region33: #{tpu_custom_call.1} parent=5 // pred_check
        %p257 = pneg %p256
      $region34: #{tpu_custom_call.1} parent=5 // pred_check_branch
        %259 = sbr.rel (%p257) target = $region36
      $region35: #{tpu_custom_call.1} parent=5 // pred_region
        // Predicated region
        $region37: #{tpu_custom_call.1} parent=35 // pred_check
          %p260 = pneg %p37
        $region38: #{tpu_custom_call.1} parent=35 // pred_check_branch
          %262 = sbr.rel (%p260) target = $region40
        $region39: #{tpu_custom_call.1} parent=35 // pred_region
          %p263 = scmp.lt.s32.totalorder %s17, 1
          %s264 = scalar_select %p263, %s17, 1
          %s265 = smul.addr %s264, 3
          %s266 = smul.addr %s265, 8
          %s267 = scalar_lea.vmem %s0, %s266
        $region40: #{tpu_custom_call.1} parent=35 // pred_fallthru
          _
        // Predicated region
        $region41: #{tpu_custom_call.1} parent=35 // pred_check
          %p268 = pneg %p63
        $region42: #{tpu_custom_call.1} parent=35 // pred_check_branch
          %270 = sbr.rel (%p268) target = $region44
        $region43: #{tpu_custom_call.1} parent=35 // pred_region
          %p271 = scmp.lt.s32.totalorder %s17, 1
          %s272 = scalar_select %p271, %s17, 1
          %s273 = smul.addr %s272, 8
          %s274 = scalar_lea.vmem %s1, %s273
        $region44: #{tpu_custom_call.1} parent=35 // pred_fallthru
          _
        // Predicated region
        $region45: #{tpu_custom_call.1} parent=35 // pred_check
          %p275 = pneg %p89
        $region46: #{tpu_custom_call.1} parent=35 // pred_check_branch
          %277 = sbr.rel (%p275) target = $region48
        $region47: #{tpu_custom_call.1} parent=35 // pred_region
          %p278 = scmp.lt.s32.totalorder %s17, 1
          %s279 = scalar_select %p278, %s17, 1
          %s280 = smul.addr %s279, 8
          %s281 = scalar_lea.vmem %s2, %s280
        $region48: #{tpu_custom_call.1} parent=35 // pred_fallthru
          _
      $region36: #{tpu_custom_call.1} parent=5 // pred_fallthru
        _
      %p282 = scmp.le.s32.totalorder 1, %s17
      %p283 = scmp.lt.s32.totalorder %s17, 3
      %p284 = pnand %p282, %p283
      %p285 = pneg %p284
      // Predicated region
      $region49: #{tpu_custom_call.1} parent=5 // pred_check
        _
      $region50: #{tpu_custom_call.1} parent=5 // pred_check_branch
        %287 = sbr.rel (%p284) target = $region52
      $region51: #{tpu_custom_call.1} parent=5 // pred_region
        %s288 = ssub.s32 %s17, 1
        %p289 = scmp.lt.s32.totalorder %s22, 1
        %s290 = scalar_select %p289, %s22, 1
        %s291 = smul.addr %s290, 3
        %s292 = smul.addr %s291, 8
        %s293 = scalar_lea.vmem %s0, %s292
        %p294 = pneg %p43
        %p295 = pneg %p40
        %p296 = scmp.lt.s32.totalorder %s22, 1
        %s297 = scalar_select %p296, %s22, 1
        %s298 = smul.addr %s297, 8
        %s299 = scalar_lea.vmem %s1, %s298
        %p300 = pneg %p69
        %p301 = pneg %p66
        %p302 = scmp.lt.s32.totalorder %s22, 1
        %s303 = scalar_select %p302, %s22, 1
        %s304 = smul.addr %s303, 8
        %s305 = scalar_lea.vmem %s2, %s304
        %p306 = pneg %p95
        %p307 = pneg %p92
        %p308 = pneg %p116
        %p309 = pneg %p113
        %p310 = pneg %p137
        %p311 = pneg %p134
        %p312 = pneg %p158
        %p313 = pneg %p155
        %p314 = pneg %p179
        %p315 = pneg %p176
        %p316 = pneg %p200
        %p317 = pneg %p197
        %p318 = pneg %p226
        %p319 = pneg %p223
        %s320 = sand.u32 %s213, 1
        %s321 = scalar_lea.sflag [#allocation3], %s320
        %s322 = sand.u32 %s213, 1
        %s323 = smul.addr %s322, 8
        %s324 = scalar_lea.vmem [#allocation2], %s323
        %p325 = scmp.lt.s32.totalorder %s22, 1
        %s326 = scalar_select %p325, %s22, 1
        %s327 = smul.addr %s326, 3
        %s328 = smul.addr %s327, 8
        %s329 = scalar_lea.vmem %s0, %s328
        %p330 = scmp.lt.s32.totalorder %s22, 1
        %s331 = scalar_select %p330, %s22, 1
        %s332 = smul.addr %s331, 8
        %s333 = scalar_lea.vmem %s1, %s332
        %p334 = scmp.lt.s32.totalorder %s22, 1
        %s335 = scalar_select %p334, %s22, 1
        %s336 = smul.addr %s335, 8
        %s337 = scalar_lea.vmem %s2, %s336
        %v338 = vld [vmem:[%s329] sm:$0xff]
        %v339 = vld [vmem:[%s329 + $0x8] sm:$0xff]
        %v340 = vld [vmem:[%s329 + $0x10] sm:$0xff]
        %v341 = vld [vmem:[%s3] sm:$0xff]
        %v342 = vld [vmem:[%s3 + $0x8] sm:$0xff]
        %v343 = vld [vmem:[%s3 + $0x10] sm:$0xff]
        %v344 = vld [vmem:[%s3 + $0x18] sm:$0xff]
        %v345 = vld [vmem:[%s3 + $0x20] sm:$0xff]
        %v346 = vld [vmem:[%s3 + $0x28] sm:$0xff]
        %v347 = vld [vmem:[%s3 + $0x30] sm:$0xff]
        %v348 = vld [vmem:[%s3 + $0x38] sm:$0xff]
        %v349 = vld [vmem:[%s3 + $0x40] sm:$0xff]
        %v350 = vld [vmem:[%s3 + $0x48] sm:$0xff]
        %v351 = vld [vmem:[%s3 + $0x50] sm:$0xff]
        %v352 = vld [vmem:[%s3 + $0x58] sm:$0xff]
        %v353 = vld [vmem:[%s3 + $0x60] sm:$0xff]
        %v354 = vld [vmem:[%s3 + $0x68] sm:$0xff]
        %v355 = vld [vmem:[%s3 + $0x70] sm:$0xff]
        %v356 = vld [vmem:[%s3 + $0x78] sm:$0xff]
        %v357 = vld [vmem:[%s3 + $0x80] sm:$0xff]
        %v358 = vld [vmem:[%s3 + $0x88] sm:$0xff]
        %v359 = vld [vmem:[%s3 + $0x90] sm:$0xff]
        %v360 = vld [vmem:[%s3 + $0x98] sm:$0xff]
        %v361 = vld [vmem:[%s3 + $0xa0] sm:$0xff]
        %v362 = vld [vmem:[%s3 + $0xa8] sm:$0xff]
        %v363 = vld [vmem:[%s3 + $0xb0] sm:$0xff]
        %v364 = vld [vmem:[%s3 + $0xb8] sm:$0xff]
        %v365 = vld [vmem:[%s3 + $0xc0] sm:$0xff]
        %v366 = vld [vmem:[%s3 + $0xc8] sm:$0xff]
        %v367 = vld [vmem:[%s3 + $0xd0] sm:$0xff]
        %v368 = vld [vmem:[%s3 + $0xd8] sm:$0xff]
        %v369 = vld [vmem:[%s3 + $0xe0] sm:$0xff]
        %v370 = vld [vmem:[%s3 + $0xe8] sm:$0xff]
        %v371 = vld [vmem:[%s3 + $0xf0] sm:$0xff]
        %v372 = vld [vmem:[%s3 + $0xf8] sm:$0xff]
        %v373 = vld [vmem:[%s3 + $0x100] sm:$0xff]
        %v374 = vld [vmem:[%s3 + $0x108] sm:$0xff]
        %v375 = vld [vmem:[%s3 + $0x110] sm:$0xff]
        %v376 = vld [vmem:[%s3 + $0x118] sm:$0xff]
        %v377 = vld [vmem:[%s337] sm:$0xff]
        %vm378 = vcmask 261120
        %v380 = vsel %vm378, %v340, 0
        %382 = vmatprep.subr.mxu0 0.0
        %383 = vmatpush1.msra.mxu0 %v341
        %384 = vmatprep.subr.mxu0 0.0
        %385 = vmatpush1.msra.mxu0 %v342
        %386 = vmatprep.subr.mxu0 0.0
        %387 = vmatpush1.msra.mxu0 %v343
        %388 = vmatprep.subr.mxu0 0.0
        %389 = vmatpush1.msra.mxu0 %v344
        %390 = vmatprep.subr.mxu0 0.0
        %391 = vmatpush1.msra.mxu0 %v345
        %392 = vmatprep.subr.mxu0 0.0
        %393 = vmatpush1.msra.mxu0 %v346
        %394 = vmatprep.subr.mxu0 0.0
        %395 = vmatpush1.msra.mxu0 %v347
        %396 = vmatprep.subr.mxu0 0.0
        %397 = vmatpush1.msra.mxu0 %v348
        %398 = vmatprep.subr.mxu0 0.0
        %399 = vmatpush1.msra.mxu0 %v349
        %400 = vmatprep.subr.mxu0 0.0
        %401 = vmatpush1.msra.mxu0 %v350
        %402 = vmatprep.subr.mxu0 0.0
        %403 = vmatpush1.msra.mxu0 %v351
        %404 = vmatprep.subr.mxu0 0.0
        %405 = vmatpush1.msra.mxu0 %v352
        %406 = vmatprep.subr.mxu0 0.0
        %407 = vmatpush1.msra.mxu0 %v353
        %408 = vmatprep.subr.mxu0 0.0
        %409 = vmatpush1.msra.mxu0 %v354
        %410 = vmatprep.subr.mxu0 0.0
        %411 = vmatpush1.msra.mxu0 %v355
        %412 = vmatprep.subr.mxu0 0.0
        %413 = vmatpush1.msra.mxu0 %v356
        %414 = vmatprep.subr.mxu0 0.0
        %415 = vmatpush1.msra.mxu0 %v357
        %416 = vmatprep.subr.mxu0 0.0
        %417 = vmatpush1.msra.mxu0 %v358
        %418 = vmatprep.subr.mxu0 0.0
        %419 = vmatpush1.msra.mxu0 %v359
        %420 = vmatprep.subr.mxu0 0.0
        %421 = vmatpush1.msra.mxu0 %v360
        %422 = vmatprep.subr.mxu0 0.0
        %423 = vmatpush1.msra.mxu0 %v361
        %424 = vmatprep.subr.mxu0 0.0
        %425 = vmatpush1.msra.mxu0 %v362
        %426 = vmatprep.subr.mxu0 0.0
        %427 = vmatpush1.msra.mxu0 %v363
        %428 = vmatprep.subr.mxu0 0.0
        %429 = vmatpush1.msra.mxu0 %v364
        %430 = vmatprep.subr.mxu0 0.0
        %431 = vmatpush1.msra.mxu0 %v365
        %432 = vmatprep.subr.mxu0 0.0
        %433 = vmatpush1.msra.mxu0 %v366
        %434 = vmatprep.subr.mxu0 0.0
        %435 = vmatpush1.msra.mxu0 %v367
        %436 = vmatprep.subr.mxu0 0.0
        %437 = vmatpush1.msra.mxu0 %v368
        %438 = vmatprep.subr.mxu0 0.0
        %439 = vmatpush1.msra.mxu0 %v369
        %440 = vmatprep.subr.mxu0 0.0
        %441 = vmatpush1.msra.mxu0 %v370
        %442 = vmatprep.subr.mxu0 0.0
        %443 = vmatpush1.msra.mxu0 %v371
        %444 = vmatprep.subr.mxu0 0.0
        %445 = vmatpush1.msra.mxu0 %v372
        %446 = vmatprep.mubr.f32.mxu0 %v339
        %447 = vmatmul.mubr.f32.gmra.mrb[0].mxu0 %v338
        %v448 = vpop.f32.mrb[0].mxu0
        %v449 = vadd.f32 %v377, %v448
        %v450 = vpop.f32.mrb[0].mxu0
        %451 = vdwg.mxu0
        %452 = vmatprep.subr.mxu0 0.0
        %453 = vmatpush1.msra.mxu0 %v373
        %454 = vmatprep.subr.mxu0 0.0
        %455 = vmatpush1.msra.mxu0 %v374
        %456 = vmatprep.subr.mxu0 0.0
        %457 = vmatpush1.msra.mxu0 %v375
        %458 = vmatprep.subr.mxu0 0.0
        %459 = vmatpush1.msra.mxu0 %v376
        %460 = vmatprep.subr.mxu0 0.0
        %461 = vmatpush1.msra.mxu0 0.0
        %462 = vmatprep.subr.mxu0 0.0
        %463 = vmatpush1.msra.mxu0 0.0
        %464 = vmatprep.subr.mxu0 0.0
        %465 = vmatpush1.msra.mxu0 0.0
        %466 = vmatprep.subr.mxu0 0.0
        %467 = vmatpush1.msra.mxu0 0.0
        %468 = vmatprep.subr.mxu0 0.0
        %469 = vmatpush1.msra.mxu0 0.0
        %470 = vmatprep.subr.mxu0 0.0
        %471 = vmatpush1.msra.mxu0 0.0
        %472 = vmatprep.subr.mxu0 0.0
        %473 = vmatpush1.msra.mxu0 0.0
        %474 = vmatprep.subr.mxu0 0.0
        %475 = vmatpush1.msra.mxu0 0.0
        %476 = vmatprep.subr.mxu0 0.0
        %477 = vmatpush1.msra.mxu0 0.0
        %478 = vmatprep.subr.mxu0 0.0
        %479 = vmatpush1.msra.mxu0 0.0
        %480 = vmatprep.subr.mxu0 0.0
        %481 = vmatpush1.msra.mxu0 0.0
        %482 = vmatprep.subr.mxu0 0.0
        %483 = vmatpush1.msra.mxu0 0.0
        %484 = vmatprep.subr.mxu0 0.0
        %485 = vmatpush1.msra.mxu0 0.0
        %486 = vmatprep.subr.mxu0 0.0
        %487 = vmatpush1.msra.mxu0 0.0
        %488 = vmatprep.subr.mxu0 0.0
        %489 = vmatpush1.msra.mxu0 0.0
        %490 = vmatprep.subr.mxu0 0.0
        %491 = vmatpush1.msra.mxu0 0.0
        %492 = vmatprep.subr.mxu0 0.0
        %493 = vmatpush1.msra.mxu0 0.0
        %494 = vmatprep.subr.mxu0 0.0
        %495 = vmatpush1.msra.mxu0 0.0
        %496 = vmatprep.subr.mxu0 0.0
        %497 = vmatpush1.msra.mxu0 0.0
        %498 = vmatprep.subr.mxu0 0.0
        %499 = vmatpush1.msra.mxu0 0.0
        %500 = vmatprep.subr.mxu0 0.0
        %501 = vmatpush1.msra.mxu0 0.0
        %502 = vmatprep.subr.mxu0 0.0
        %503 = vmatpush1.msra.mxu0 0.0
        %504 = vmatprep.subr.mxu0 0.0
        %505 = vmatpush1.msra.mxu0 0.0
        %506 = vmatprep.subr.mxu0 0.0
        %507 = vmatpush1.msra.mxu0 0.0
        %508 = vmatprep.subr.mxu0 0.0
        %509 = vmatpush1.msra.mxu0 0.0
        %510 = vmatprep.subr.mxu0 0.0
        %511 = vmatpush1.msra.mxu0 0.0
        %512 = vmatprep.subr.mxu0 0.0
        %513 = vmatpush1.msra.mxu0 0.0
        %514 = vmatprep.subr.mxu0 0.0
        %515 = vmatpush1.msra.mxu0 0.0
        %516 = vmatprep.mubr.f32.mxu0 0.0
        %517 = vmatmul.mubr.f32.gmra.mrb[0].mxu0 %v380
        %v518 = vpop.f32.mrb[0].mxu0
        %v519 = vadd.f32 %v449, %v518
        %v520 = vpop.f32.mrb[0].mxu0
        %521 = vdwg.mxu0
        %v522 = vmax.f32 %v519, 0.0
        %v523 = vld [vmem:[%s333] sm:$0xff]
        %v524 = vld [vmem:[%s4] sm:$0xff]
        %v525 = vld [vmem:[%s4 + $0x8] sm:$0xff]
        %v526 = vld [vmem:[%s4 + $0x10] sm:$0xff]
        %v527 = vld [vmem:[%s4 + $0x18] sm:$0xff]
        %v528 = vld [vmem:[%s6] sm:$0x1]
        %v530 = vlaneseq
        %v531 = vshrl.u32 %v530, 7
        %v532 = vsub.s32 0, %v531
        %v533 = vrot.slane %v528, %v532
        %v536 = vsel %vm378, %v522, 0
        %538 = vmatprep.subr.mxu0 0.0
        %539 = vmatpush1.msra.mxu0 %v524
        %540 = vmatprep.subr.mxu0 0.0
        %541 = vmatpush1.msra.mxu0 %v525
        %542 = vmatprep.subr.mxu0 0.0
        %543 = vmatpush1.msra.mxu0 %v526
        %544 = vmatprep.subr.mxu0 0.0
        %545 = vmatpush1.msra.mxu0 %v527
        %546 = vmatprep.subr.mxu0 0.0
        %547 = vmatpush1.msra.mxu0 0.0
        %548 = vmatprep.subr.mxu0 0.0
        %549 = vmatpush1.msra.mxu0 0.0
        %550 = vmatprep.subr.mxu0 0.0
        %551 = vmatpush1.msra.mxu0 0.0
        %552 = vmatprep.subr.mxu0 0.0
        %553 = vmatpush1.msra.mxu0 0.0
        %554 = vmatprep.subr.mxu0 0.0
        %555 = vmatpush1.msra.mxu0 0.0
        %556 = vmatprep.subr.mxu0 0.0
        %557 = vmatpush1.msra.mxu0 0.0
        %558 = vmatprep.subr.mxu0 0.0
        %559 = vmatpush1.msra.mxu0 0.0
        %560 = vmatprep.subr.mxu0 0.0
        %561 = vmatpush1.msra.mxu0 0.0
        %562 = vmatprep.subr.mxu0 0.0
        %563 = vmatpush1.msra.mxu0 0.0
        %564 = vmatprep.subr.mxu0 0.0
        %565 = vmatpush1.msra.mxu0 0.0
        %566 = vmatprep.subr.mxu0 0.0
        %567 = vmatpush1.msra.mxu0 0.0
        %568 = vmatprep.subr.mxu0 0.0
        %569 = vmatpush1.msra.mxu0 0.0
        %570 = vmatprep.subr.mxu0 0.0
        %571 = vmatpush1.msra.mxu0 0.0
        %572 = vmatprep.subr.mxu0 0.0
        %573 = vmatpush1.msra.mxu0 0.0
        %574 = vmatprep.subr.mxu0 0.0
        %575 = vmatpush1.msra.mxu0 0.0
        %576 = vmatprep.subr.mxu0 0.0
        %577 = vmatpush1.msra.mxu0 0.0
        %578 = vmatprep.subr.mxu0 0.0
        %579 = vmatpush1.msra.mxu0 0.0
        %580 = vmatprep.subr.mxu0 0.0
        %581 = vmatpush1.msra.mxu0 0.0
        %582 = vmatprep.subr.mxu0 0.0
        %583 = vmatpush1.msra.mxu0 0.0
        %584 = vmatprep.subr.mxu0 0.0
        %585 = vmatpush1.msra.mxu0 0.0
        %586 = vmatprep.subr.mxu0 0.0
        %587 = vmatpush1.msra.mxu0 0.0
        %588 = vmatprep.subr.mxu0 0.0
        %589 = vmatpush1.msra.mxu0 0.0
        %590 = vmatprep.subr.mxu0 0.0
        %591 = vmatpush1.msra.mxu0 0.0
        %592 = vmatprep.subr.mxu0 0.0
        %593 = vmatpush1.msra.mxu0 0.0
        %594 = vmatprep.subr.mxu0 0.0
        %595 = vmatpush1.msra.mxu0 0.0
        %596 = vmatprep.subr.mxu0 0.0
        %597 = vmatpush1.msra.mxu0 0.0
        %598 = vmatprep.subr.mxu0 0.0
        %599 = vmatpush1.msra.mxu0 0.0
        %600 = vmatprep.subr.mxu0 0.0
        %601 = vmatpush1.msra.mxu0 0.0
        %602 = vmatprep.mubr.f32.mxu0 0.0
        %603 = vmatmul.mubr.f32.gmra.mrb[0].mxu0 %v536
        %v604 = vpop.f32.mrb[0].mxu0
        %v605 = vadd.f32 %v533, %v604
        %v606 = vpop.f32.mrb[0].mxu0
        %607 = vdwg.mxu0
        %v608 = vld [vmem:[%s5] sm:$0xff]
        %v609 = vld [vmem:[%s5 + $0x8] sm:$0xff]
        %v610 = vld [vmem:[%s5 + $0x10] sm:$0xff]
        %v611 = vld [vmem:[%s5 + $0x18] sm:$0xff]
        %v612 = vld [vmem:[%s7] sm:$0x1]
        %v614 = vlaneseq
        %v615 = vshrl.u32 %v614, 7
        %v616 = vsub.s32 0, %v615
        %v617 = vrot.slane %v612, %v616
        %v620 = vsel %vm378, %v523, 0
        %622 = vmatprep.subr.mxu0 0.0
        %623 = vmatpush1.msra.mxu0 %v608
        %624 = vmatprep.subr.mxu0 0.0
        %625 = vmatpush1.msra.mxu0 %v609
        %626 = vmatprep.subr.mxu0 0.0
        %627 = vmatpush1.msra.mxu0 %v610
        %628 = vmatprep.subr.mxu0 0.0
        %629 = vmatpush1.msra.mxu0 %v611
        %630 = vmatprep.subr.mxu0 0.0
        %631 = vmatpush1.msra.mxu0 0.0
        %632 = vmatprep.subr.mxu0 0.0
        %633 = vmatpush1.msra.mxu0 0.0
        %634 = vmatprep.subr.mxu0 0.0
        %635 = vmatpush1.msra.mxu0 0.0
        %636 = vmatprep.subr.mxu0 0.0
        %637 = vmatpush1.msra.mxu0 0.0
        %638 = vmatprep.subr.mxu0 0.0
        %639 = vmatpush1.msra.mxu0 0.0
        %640 = vmatprep.subr.mxu0 0.0
        %641 = vmatpush1.msra.mxu0 0.0
        %642 = vmatprep.subr.mxu0 0.0
        %643 = vmatpush1.msra.mxu0 0.0
        %644 = vmatprep.subr.mxu0 0.0
        %645 = vmatpush1.msra.mxu0 0.0
        %646 = vmatprep.subr.mxu0 0.0
        %647 = vmatpush1.msra.mxu0 0.0
        %648 = vmatprep.subr.mxu0 0.0
        %649 = vmatpush1.msra.mxu0 0.0
        %650 = vmatprep.subr.mxu0 0.0
        %651 = vmatpush1.msra.mxu0 0.0
        %652 = vmatprep.subr.mxu0 0.0
        %653 = vmatpush1.msra.mxu0 0.0
        %654 = vmatprep.subr.mxu0 0.0
        %655 = vmatpush1.msra.mxu0 0.0
        %656 = vmatprep.subr.mxu0 0.0
        %657 = vmatpush1.msra.mxu0 0.0
        %658 = vmatprep.subr.mxu0 0.0
        %659 = vmatpush1.msra.mxu0 0.0
        %660 = vmatprep.subr.mxu0 0.0
        %661 = vmatpush1.msra.mxu0 0.0
        %662 = vmatprep.subr.mxu0 0.0
        %663 = vmatpush1.msra.mxu0 0.0
        %664 = vmatprep.subr.mxu0 0.0
        %665 = vmatpush1.msra.mxu0 0.0
        %666 = vmatprep.subr.mxu0 0.0
        %667 = vmatpush1.msra.mxu0 0.0
        %668 = vmatprep.subr.mxu0 0.0
        %669 = vmatpush1.msra.mxu0 0.0
        %670 = vmatprep.subr.mxu0 0.0
        %671 = vmatpush1.msra.mxu0 0.0
        %672 = vmatprep.subr.mxu0 0.0
        %673 = vmatpush1.msra.mxu0 0.0
        %674 = vmatprep.subr.mxu0 0.0
        %675 = vmatpush1.msra.mxu0 0.0
        %676 = vmatprep.subr.mxu0 0.0
        %677 = vmatpush1.msra.mxu0 0.0
        %678 = vmatprep.subr.mxu0 0.0
        %679 = vmatpush1.msra.mxu0 0.0
        %680 = vmatprep.subr.mxu0 0.0
        %681 = vmatpush1.msra.mxu0 0.0
        %682 = vmatprep.subr.mxu0 0.0
        %683 = vmatpush1.msra.mxu0 0.0
        %684 = vmatprep.subr.mxu0 0.0
        %685 = vmatpush1.msra.mxu0 0.0
        %686 = vmatprep.mubr.f32.mxu0 0.0
        %687 = vmatmul.mubr.f32.gmra.mrb[0].mxu0 %v620
        %v688 = vpop.f32.mrb[0].mxu0
        %v689 = vadd.f32 %v617, %v688
        %v690 = vpop.f32.mrb[0].mxu0
        %691 = vdwg.mxu0
        %v692 = vadd.f32 %v605, %v689
        %v693 = vxor.u32 %v692, 2147483648
        %v694 = vmul.f32 %v693, 1.442695
        %v695 = vpow.pop %v694
        %v696 = vadd.f32 %v695, 1.0
        %v697 = vrcp.pop %v696
        %v698 = vmul.f32 1.0, %v697
        %700 = vrot.lane.b32.xlu0 %v689, 64
        %v701 = vpop.permute.xlu0 %700
        %v703 = vmul.f32 %v698, %v701
        %705 = vrot.lane.b32.xlu0 %v703, 64
        %v706 = vpop.permute.xlu0 %705
        %v708 = vadd.f32 %v605, %v706
        %v709 = vtanh.pop %v708
        %v710 = vsub.f32 1.0, %v698
        %712 = vrot.lane.b32.xlu0 %v709, 96
        %v713 = vpop.permute.xlu0 %712
        %v715 = vmul.f32 %v710, %v713
        %716 = vrot.lane.b32.xlu0 %v523, 32
        %v717 = vpop.permute.xlu0 %716
        %v719 = vmul.f32 %v698, %v717
        %v720 = vadd.f32 %v715, %v719
        %722 = vrot.lane.b32.xlu0 %v720, 96
        %v723 = vpop.permute.xlu0 %722
        %725 = vst.msk [vmem:[%s324] sm:$0xff] %vm378, %v723
        %s726 = sand.u32 %s213, 1
        %s727 = scalar_lea.sflag [#allocation3], %s726
        %s728 = sand.u32 %s213, 1
        %s729 = smul.addr %s728, 8
        %s730 = scalar_lea.vmem [#allocation2], %s729
        // Predicated region
        $region53: #{tpu_custom_call.1} parent=51 // pred_check
          %p731 = pneg %p223
        $region54: #{tpu_custom_call.1} parent=51 // pred_check_branch
          %733 = sbr.rel (%p731) target = $region56
        $region55: #{tpu_custom_call.1} parent=51 // pred_region
          %s735 = ssub.s32 128, 128
          %736 = vsyncadd %s727, %s735
          %s737 = smul.addr %s22, 128
          %s738 = scalar_lea.hbm %s8, %s737
          %s740 = sshll.u32 %s730, 4
          %s741 = int_to_ptr.vmem [resolvable:$true] %s740
          %743 = dma.vmem_to_hbm [thread:$0]  %s741, 128, %s738, %s727
        $region56: #{tpu_custom_call.1} parent=51 // pred_fallthru
          _
      $region52: #{tpu_custom_call.1} parent=5 // pred_fallthru
        _
      %p744 = scmp.le.s32.totalorder 2, %s17
      // Predicated region
      $region57: #{tpu_custom_call.1} parent=5 // pred_check
        %p745 = pneg %p744
      $region58: #{tpu_custom_call.1} parent=5 // pred_check_branch
        %747 = sbr.rel (%p745) target = $region60
      $region59: #{tpu_custom_call.1} parent=5 // pred_region
        %s748 = ssub.s32 %s17, 2
        // Predicated region
        $region61: #{tpu_custom_call.1} parent=59 // pred_check
          %p749 = pneg %p229
        $region62: #{tpu_custom_call.1} parent=59 // pred_check_branch
          %751 = sbr.rel (%p749) target = $region64
        $region63: #{tpu_custom_call.1} parent=59 // pred_region
          %s752 = sand.u32 %s214, 1
          %s753 = scalar_lea.sflag [#allocation3], %s752
          %s754 = sand.u32 %s214, 1
          %s755 = smul.addr %s754, 8
          %s756 = scalar_lea.vmem [#allocation2], %s755
          %757 = dma.done %s753, 128
        $region64: #{tpu_custom_call.1} parent=59 // pred_fallthru
          _
      $region60: #{tpu_custom_call.1} parent=5 // pred_fallthru
        _
    $region6: #{tpu_custom_call.1} parent=1 // loop_footer
      %s21 = sadd.s32 1, %s17
    $region7: #{tpu_custom_call.1} parent=1 // loop_footer_branch
      %16 = sbr.rel target = $region3
    $region8: #{tpu_custom_call.1} parent=1 // loop_exit
      _
    %758 = vsyncpa [#allocation3], 1
    %s759 = scalar_lea.sflag [#allocation3], 1
    %760 = vsyncpa %s759, 1

</llo_original>
